<compile_context>
chip_gen: v7x
topology: tpu7x:2x2x1
jax: 0.10.0
libtpu: 0.0.40
codegen_flags: <defaults>
</compile_context>

<pallas_src>
import math
import jax
import jax.numpy as jnp
from jax import lax
from jax.experimental import pallas as pl
from jax.experimental.pallas import tpu as pltpu

_K = 3  # kernel_size
_S = 3  # stride (torch.nn.MaxPool2d defaults stride = kernel_size)


def _pooled_size(n, k, s):
    """PyTorch ceil_mode output size (padding=0, dilation=1)."""
    out = math.ceil((n - k) / s) + 1
    if (out - 1) * s >= n:      # last window must start inside the input
        out -= 1
    return out


def _round_up(x, m):
    return (x + m - 1) // m * m


def _make_kernel(h, w, h_out, w_out):
    pad_h = (h_out - 1) * _S + _K - h            # ceil_mode overhang along H
    pad_w = (w_out - 1) * _S + _K - w            # ceil_mode overhang along W
    h_main = h_out - 1 if pad_h > 0 else h_out   # rows whose window is fully in-bounds
    w_main = w_out - 1 if pad_w > 0 else w_out
    h_last_k = h - (h_out - 1) * _S              # valid taps in the ragged last window
    w_last_k = w - (w_out - 1) * _S

    def _pool_sublanes(ref, n_main, n_out, last_k, ragged):
        """Max-pool axis 1 (sublanes) of a (bc, L, lanes) ref with stride _S."""
        parts = []
        if n_main > 0:
            acc = ref[:, pl.ds(0, n_main, _S), :]
            for k in range(1, _K):
                acc = jnp.maximum(acc, ref[:, pl.ds(k, n_main, _S), :])
            parts.append(acc)
        if ragged:                               # reduced-tap (static) last window
            start = (n_out - 1) * _S
            acc = ref[:, pl.ds(start, 1), :]
            for k in range(1, last_k):
                acc = jnp.maximum(acc, ref[:, pl.ds(start + k, 1), :])
            parts.append(acc)
        return parts[0] if len(parts) == 1 else jnp.concatenate(parts, axis=1)

    def kernel(x_ref, o_ref, yt_ref):
        # x_ref : (bc, h, w)        o_ref : (bc, h_out, w_out)
        # yt_ref: (bc, w, h_out)    staging buffer with W on the sublane axis
        # Pass 1: pool along H via strided sublane loads (input read exactly once).
        y = _pool_sublanes(x_ref, h_main, h_out, h_last_k, pad_h > 0)   # (bc, h_out, w)
        # Single XLU transpose: put W on sublanes for pass 2.
        yt_ref[...] = jnp.swapaxes(y, 1, 2)                             # (bc, w, h_out)
        # Pass 2: pool along W via strided sublane loads.
        z = _pool_sublanes(yt_ref, w_main, w_out, w_last_k, pad_w > 0)  # (bc, w_out, h_out)
        # One dense store of the whole output block.
        o_ref[...] = jnp.swapaxes(z, 1, 2)                              # (bc, h_out, w_out)

    return kernel


def _vmem_budgets():
    """Generation-aware (VMEM-capacity-derived) block budget and scoped limit."""
    cap = 64 * 1024 * 1024                        # conservative fallback (v7x per-TC)
    try:
        info = pltpu.get_tpu_info()
        cap = int(getattr(info, "vmem_capacity_bytes", cap))
    except Exception:
        pass
    cap = max(cap, 32 * 1024 * 1024)
    block_budget = min(cap // 6, 24 * 1024 * 1024)    # ~21 MiB v5e/v6e, ~10.7 MiB v7x
    vmem_limit = min((cap * 3) // 4, 96 * 1024 * 1024)
    return block_budget, vmem_limit


def _choose_block_channels(nc, h, w, h_out, w_out, dtype, block_budget):
    """Channels per block, sized against VMEM with (sublane, lane) tile padding."""
    itemsize = jnp.dtype(dtype).itemsize
    sub = 8 * max(1, 4 // itemsize)               # sublane tile grows with dtype packing

    def padded_bytes(a, b):
        return _round_up(a, sub) * _round_up(b, 128) * itemsize

    per_ch = (2 * (padded_bytes(h, w) + padded_bytes(h_out, w_out))   # double-buffered i/o
              + padded_bytes(w, h_out))                                # staging scratch
    bc = max(1, block_budget // per_ch)
    if nc >= 2:                                    # keep >= 2 blocks for v7x's 2 TCs
        bc = min(bc, pl.cdiv(nc, 2))
    bc = min(bc, nc)
    bc = pl.cdiv(nc, pl.cdiv(nc, bc))              # balance block sizes across the grid
    return int(bc)


def tudui_forward(x):
    """Tudui.forward: MaxPool2d(kernel_size=3, ceil_mode=True) on NCHW input."""
    n, c, h, w = x.shape
    h_out = _pooled_size(h, _K, _S)
    w_out = _pooled_size(w, _K, _S)

    nc = n * c
    xf = x.reshape(nc, h, w)                       # fold N*C into one grid axis (free)

    block_budget, vmem_limit = _vmem_budgets()
    bc = _choose_block_channels(nc, h, w, h_out, w_out, x.dtype, block_budget)
    kernel = _make_kernel(h, w, h_out, w_out)

    itemsize = jnp.dtype(x.dtype).itemsize
    out_elems = nc * h_out * w_out

    yf = pl.pallas_call(
        kernel,
        out_shape=jax.ShapeDtypeStruct((nc, h_out, w_out), x.dtype),
        grid=(pl.cdiv(nc, bc),),
        in_specs=[pl.BlockSpec((bc, h, w), lambda i: (i, 0, 0))],
        out_specs=pl.BlockSpec((bc, h_out, w_out), lambda i: (i, 0, 0)),
        scratch_shapes=[pltpu.VMEM((bc, w, h_out), x.dtype)],
        compiler_params=pltpu.CompilerParams(
            dimension_semantics=("parallel",),
            vmem_limit_bytes=int(vmem_limit)),
        cost_estimate=pl.CostEstimate(
            flops=(_K * _K) * out_elems,
            transcendentals=0,
            bytes_accessed=(x.size + out_elems) * itemsize),
    )(xf)
    return yf.reshape(n, c, h_out, w_out)


if __name__ == "__main__":
    # MaxPool2d is parameter-free; just a deterministic input.
    key = jax.random.PRNGKey(0)
    x = jax.random.normal(key, (2, 4, 16, 16), dtype=jnp.float32)

    out = jax.block_until_ready(tudui_forward(x))
    assert out.shape == (2, 4, 6, 6), out.shape

    # Reference: lax.reduce_window emulating ceil_mode via trailing -inf padding.
    h_out = _pooled_size(16, _K, _S)
    w_out = _pooled_size(16, _K, _S)
    pad_h = (h_out - 1) * _S + _K - 16
    pad_w = (w_out - 1) * _S + _K - 16
    ref = lax.reduce_window(
        x, -jnp.inf, lax.max,
        window_dimensions=(1, 1, _K, _K),
        window_strides=(1, 1, _S, _S),
        padding=((0, 0), (0, 0), (0, pad_h), (0, pad_w)),
    )
    assert jnp.allclose(out, ref), "Pallas maxpool mismatch vs reference"
    print("KERNEL_OK")
</pallas_src>

<mosaic_0001>
module attributes {stable_mosaic.version = 11 : i64} {
  func.func @kernel(%arg0: i32, %arg1: memref<4x16x16xf32, #tpu.memory_space<vmem>>, %arg2: memref<4x6x6xf32, #tpu.memory_space<vmem>>, %arg3: memref<4x16x6xf32, #tpu.memory_space<vmem>>) attributes {dimension_semantics = [#tpu.dimension_semantics<parallel>], iteration_bounds = array<i64: 2>, scalar_prefetch = 0 : i64, scratch_operands = 1 : i64, tpu.core_type = #tpu.core_type<tc>, window_params = [{transform_indices = @transform_0, window_bounds = array<i64: 4, 16, 16>}, {transform_indices = @transform_1, window_bounds = array<i64: 4, 6, 6>}]} {
    %c0 = arith.constant 0 : index
    %c0_0 = arith.constant 0 : index
    %c0_1 = arith.constant 0 : index
    %0 = tpu.strided_load %arg1[%c0, %c0_0, %c0_1] {strides = array<i32: 1, 3, 1>} : memref<4x16x16xf32, #tpu.memory_space<vmem>>, vector<4x5x16xf32>
    %c0_2 = arith.constant 0 : index
    %c1 = arith.constant 1 : index
    %c0_3 = arith.constant 0 : index
    %1 = tpu.strided_load %arg1[%c0_2, %c1, %c0_3] {strides = array<i32: 1, 3, 1>} : memref<4x16x16xf32, #tpu.memory_space<vmem>>, vector<4x5x16xf32>
    %2 = arith.maximumf %0, %1 : vector<4x5x16xf32>
    %c0_4 = arith.constant 0 : index
    %c2 = arith.constant 2 : index
    %c0_5 = arith.constant 0 : index
    %3 = tpu.strided_load %arg1[%c0_4, %c2, %c0_5] {strides = array<i32: 1, 3, 1>} : memref<4x16x16xf32, #tpu.memory_space<vmem>>, vector<4x5x16xf32>
    %4 = arith.maximumf %2, %3 : vector<4x5x16xf32>
    %c0_6 = arith.constant 0 : index
    %c15 = arith.constant 15 : index
    %c0_7 = arith.constant 0 : index
    %5 = vector.load %arg1[%c0_6, %c15, %c0_7] : memref<4x16x16xf32, #tpu.memory_space<vmem>>, vector<4x1x16xf32>
    %6 = tpu.concatenate %4, %5 in 1 : vector<4x5x16xf32>, vector<4x1x16xf32> -> vector<4x6x16xf32>
    %7 = tpu.transpose %6, [0, 2, 1] : vector<4x6x16xf32> -> vector<4x16x6xf32>
    %c0_8 = arith.constant 0 : index
    %c0_9 = arith.constant 0 : index
    %c0_10 = arith.constant 0 : index
    %8 = vector.load %arg3[%c0_8, %c0_9, %c0_10] : memref<4x16x6xf32, #tpu.memory_space<vmem>>, vector<4x16x6xf32>
    tpu.vector_store %arg3[%c0_8, %c0_9, %c0_10], %7 {strides = array<i32>} : memref<4x16x6xf32, #tpu.memory_space<vmem>>, vector<4x16x6xf32>,
    %c0_11 = arith.constant 0 : index
    %c0_12 = arith.constant 0 : index
    %c0_13 = arith.constant 0 : index
    %9 = tpu.strided_load %arg3[%c0_11, %c0_12, %c0_13] {strides = array<i32: 1, 3, 1>} : memref<4x16x6xf32, #tpu.memory_space<vmem>>, vector<4x5x6xf32>
    %c0_14 = arith.constant 0 : index
    %c1_15 = arith.constant 1 : index
    %c0_16 = arith.constant 0 : index
    %10 = tpu.strided_load %arg3[%c0_14, %c1_15, %c0_16] {strides = array<i32: 1, 3, 1>} : memref<4x16x6xf32, #tpu.memory_space<vmem>>, vector<4x5x6xf32>
    %11 = arith.maximumf %9, %10 : vector<4x5x6xf32>
    %c0_17 = arith.constant 0 : index
    %c2_18 = arith.constant 2 : index
    %c0_19 = arith.constant 0 : index
    %12 = tpu.strided_load %arg3[%c0_17, %c2_18, %c0_19] {strides = array<i32: 1, 3, 1>} : memref<4x16x6xf32, #tpu.memory_space<vmem>>, vector<4x5x6xf32>
    %13 = arith.maximumf %11, %12 : vector<4x5x6xf32>
    %c0_20 = arith.constant 0 : index
    %c15_21 = arith.constant 15 : index
    %c0_22 = arith.constant 0 : index
    %14 = vector.load %arg3[%c0_20, %c15_21, %c0_22] : memref<4x16x6xf32, #tpu.memory_space<vmem>>, vector<4x1x6xf32>
    %15 = tpu.concatenate %13, %14 in 1 : vector<4x5x6xf32>, vector<4x1x6xf32> -> vector<4x6x6xf32>
    %16 = tpu.transpose %15, [0, 2, 1] : vector<4x6x6xf32> -> vector<4x6x6xf32>
    %c0_23 = arith.constant 0 : index
    %c0_24 = arith.constant 0 : index
    %c0_25 = arith.constant 0 : index
    %17 = vector.load %arg2[%c0_23, %c0_24, %c0_25] : memref<4x6x6xf32, #tpu.memory_space<vmem>>, vector<4x6x6xf32>
    tpu.vector_store %arg2[%c0_23, %c0_24, %c0_25], %16 {strides = array<i32>} : memref<4x6x6xf32, #tpu.memory_space<vmem>>, vector<4x6x6xf32>,
    return
  }
  func.func @transform_0(%arg0: i32) -> (i32, i32, i32) {
    %c0_i32 = arith.constant 0 : i32
    %c0_i32_0 = arith.constant 0 : i32
    %c0_i32_1 = arith.constant 0 : i32
    return %arg0, %c0_i32, %c0_i32_0 : i32, i32, i32
  }
  func.func @transform_1(%arg0: i32) -> (i32, i32, i32) {
    %c0_i32 = arith.constant 0 : i32
    %c0_i32_0 = arith.constant 0 : i32
    %c0_i32_1 = arith.constant 0 : i32
    return %arg0, %c0_i32, %c0_i32_0 : i32, i32, i32
  }
}

</mosaic_0001>

<llo_original>
// kernel: tpu_custom_call.1
$region0: #{tpu_custom_call.1}
  #allocation0 [shape = 'u32[]', space=smem, size = 0x4, offset = 0x4, fixed_abs, tag = 'smem constant byte address 0x4 - core index']
  #allocation1 [shape = 'u32[144,128]{1,0:T(1,128)}', space=vmem, size = 0x12000, scoped, tag = 'internal scratch']
  #allocation2 [shape = 'f32[4,16,6]{2,1,0:T(8,128)}', space=vmem, size = 0x8000, scoped, tag = 'scratch operand']
  %s0 = inlined_call_operand.hbm [shape: f32[8,16,16], index: 0, kind: input, shape index: {}]
  %s1 = inlined_call_operand.vmem [shape: f32[8,6,6], index: 1, kind: output, shape index: {}]
  %s2 = sld [smem:[#allocation0]]
  $region41: #{tpu_custom_call.1} parent=0
    _
  %s4 = ssub.s32 1, %s2
  %s5 = scalar_select 0, %s4, %s2
  $region1: #{tpu_custom_call.1} parent=0
    #allocation3 [shape = 'u8[65536]{0}', space=vmem, size = 0x10000, scoped, tag = 'input window, operand 0']
    #allocation4 [shape = 's32[2]{0}', space=sflag, size = 0x8, scoped, tag = 'scoped memory for tpu_custom_call.1']
    %6 = vsyncpa [#allocation4], 0
    %s7 = scalar_lea.sflag [#allocation4], 1
    %8 = vsyncpa %s7, 0
    loop: start=0, step=1, limit=4
    $region2: #{tpu_custom_call.1} parent=1 // loop_pre_header
      _
    $region3: #{tpu_custom_call.1} parent=1 // loop_header
      %s10 = sphi 0, %s14
      %p11 = scmp.ge.s32.totalorder %s10, 4
      %s20 = sphi 0, %s22
      %s23 = sphi 0, %s20
      %s24 = sphi 0, %s23
      %s40 = sphi 0, %s24
      %s46 = sphi 0, %s48
      %s49 = sphi 0, %s46
      %s50 = sphi 0, %s49
      %s66 = sphi 0, %s50
    $region4: #{tpu_custom_call.1} parent=1 // loop_header_branch
      %13 = sbr.rel (%p11) target = $region8
    $region5: #{tpu_custom_call.1} parent=1 // loop_body
      %s15 = ssub.s32 %s10, 1
      %s16 = ssub.s32 %s10, 2
      %s17 = sadd.s32 %s10, 1
      %s18 = ssub.s32 %s10, %s17
      %p19 = scmp.eq.s32.totalorder %s18, 0
      %s21 = sadd.s32 %s20, 1
      %s22 = scalar_select %p19, %s20, %s21
      %p25 = pneg %p19
      %p26 = scmp.eq.s32.totalorder %s10, 1
      %p27 = por %p25, %p26
      %p28 = scmp.ne.s32.totalorder %s20, %s23
      %p29 = scmp.eq.s32.totalorder %s10, 0
      %p30 = por %p28, %p29
      %p31 = scmp.ne.s32.totalorder %s20, %s23
      %p32 = scmp.eq.s32.totalorder %s15, 1
      %p33 = por %p31, %p32
      %p34 = scmp.ne.s32.totalorder %s23, %s24
      %p35 = scmp.eq.s32.totalorder %s15, 0
      %p36 = por %p34, %p35
      %p37 = scmp.ne.s32.totalorder %s23, %s24
      %p38 = scmp.eq.s32.totalorder %s16, 1
      %p39 = por %p37, %p38
      %p41 = scmp.ne.s32.totalorder %s24, %s40
      %p42 = scmp.eq.s32.totalorder %s16, 0
      %p43 = por %p41, %p42
      %s44 = ssub.s32 %s10, %s17
      %p45 = scmp.eq.s32.totalorder %s44, 0
      %s47 = sadd.s32 %s46, 1
      %s48 = scalar_select %p45, %s46, %s47
      %p51 = pneg %p45
      %p52 = scmp.eq.s32.totalorder %s10, 1
      %p53 = por %p51, %p52
      %p54 = scmp.ne.s32.totalorder %s46, %s49
      %p55 = scmp.eq.s32.totalorder %s10, 0
      %p56 = por %p54, %p55
      %p57 = scmp.ne.s32.totalorder %s46, %s49
      %p58 = scmp.eq.s32.totalorder %s15, 1
      %p59 = por %p57, %p58
      %p60 = scmp.ne.s32.totalorder %s49, %s50
      %p61 = scmp.eq.s32.totalorder %s15, 0
      %p62 = por %p60, %p61
      %p63 = scmp.ne.s32.totalorder %s49, %s50
      %p64 = scmp.eq.s32.totalorder %s16, 1
      %p65 = por %p63, %p64
      %p67 = scmp.ne.s32.totalorder %s50, %s66
      %p68 = scmp.eq.s32.totalorder %s16, 0
      %p69 = por %p67, %p68
      %p70 = scmp.le.s32.totalorder 1, %s10
      %p71 = scmp.lt.s32.totalorder %s10, 3
      %p72 = pnand %p70, %p71
      %p73 = pneg %p72
      // Predicated region
      $region9: #{tpu_custom_call.1} parent=5 // pred_check
        _
      $region10: #{tpu_custom_call.1} parent=5 // pred_check_branch
        %75 = sbr.rel (%p72) target = $region12
      $region11: #{tpu_custom_call.1} parent=5 // pred_region
        %s76 = ssub.s32 %s10, 1
      $region12: #{tpu_custom_call.1} parent=5 // pred_fallthru
        _
      %p77 = scmp.lt.s32.totalorder %s10, 2
      // Predicated region
      $region13: #{tpu_custom_call.1} parent=5 // pred_check
        %p78 = pneg %p77
      $region14: #{tpu_custom_call.1} parent=5 // pred_check_branch
        %80 = sbr.rel (%p78) target = $region16
      $region15: #{tpu_custom_call.1} parent=5 // pred_region
        // Predicated region
        $region17: #{tpu_custom_call.1} parent=15 // pred_check
          %p81 = pneg %p30
        $region18: #{tpu_custom_call.1} parent=15 // pred_check_branch
          %83 = sbr.rel (%p81) target = $region20
        $region19: #{tpu_custom_call.1} parent=15 // pred_region
          %s84 = sand.u32 %s20, 1
          %s85 = scalar_lea.sflag [#allocation4], %s84
          %s86 = sand.u32 %s20, 1
          %s87 = smul.addr %s86, 64
          %s88 = scalar_lea.vmem [#allocation3], %s87
          %s89 = smul.u32 4, %s10
          %s91 = ssub.s32 1024, 1024
          %92 = vsyncadd %s85, %s91
          %s93 = smul.addr %s89, 2
          %s94 = smul.addr %s93, 128
          %s95 = scalar_lea.hbm %s0, %s94
          %s96 = sshll.u32 %s88, 4
          %s97 = int_to_ptr.vmem [resolvable:$true] %s96
          %102 = dma.hbm_to_vmem [thread:$0]  %s95, 1024, %s97, %s85, 128, 128, 8
        $region20: #{tpu_custom_call.1} parent=15 // pred_fallthru
          _
      $region16: #{tpu_custom_call.1} parent=5 // pred_fallthru
        _
      %p103 = scmp.le.s32.totalorder 1, %s10
      %p104 = scmp.lt.s32.totalorder %s10, 3
      %p105 = pnand %p103, %p104
      %p106 = pneg %p105
      // Predicated region
      $region21: #{tpu_custom_call.1} parent=5 // pred_check
        _
      $region22: #{tpu_custom_call.1} parent=5 // pred_check_branch
        %108 = sbr.rel (%p105) target = $region24
      $region23: #{tpu_custom_call.1} parent=5 // pred_region
        %s109 = ssub.s32 %s10, 1
        %s110 = sand.u32 %s23, 1
        %s111 = scalar_lea.sflag [#allocation4], %s110
        %s112 = sand.u32 %s23, 1
        %s113 = smul.addr %s112, 64
        %s114 = scalar_lea.vmem [#allocation3], %s113
        // Predicated region
        $region25: #{tpu_custom_call.1} parent=23 // pred_check
          %p115 = pneg %p36
        $region26: #{tpu_custom_call.1} parent=23 // pred_check_branch
          %117 = sbr.rel (%p115) target = $region28
        $region27: #{tpu_custom_call.1} parent=23 // pred_region
          %118 = dma.done %s111, 1024
        $region28: #{tpu_custom_call.1} parent=23 // pred_fallthru
          _
        %s119 = sand.u32 %s23, 1
        %s120 = scalar_lea.sflag [#allocation4], %s119
        %s121 = sand.u32 %s23, 1
        %s122 = smul.addr %s121, 64
        %s123 = scalar_lea.vmem [#allocation3], %s122
        %p124 = pneg %p36
        %p125 = pneg %p33
        %p126 = pneg %p62
        %p127 = pneg %p59
        %s128 = smul.u32 4, %s15
        %p129 = scmp.lt.s32.totalorder %s128, 7
        %s130 = scalar_select %p129, %s128, 7
        %s131 = smul.addr %s130, 8
        %s132 = scalar_lea.vmem %s1, %s131
        %s133 = smul.u32 4, %s15
        %s134 = smul.u32 4, %s15
        %p135 = scmp.lt.s32.totalorder %s134, 7
        %s136 = scalar_select %p135, %s134, 7
        %s137 = smul.addr %s136, 8
        %s138 = scalar_lea.vmem %s1, %s137
        %s139 = smul.u32 4, %s15
        %v140 = vld [vmem:[%s114] ss:$3 sm:$0x1f]
        %s141 = scalar_lea.vmem %s114, 16 [#allocation3]
        %v142 = vld [vmem:[%s141] ss:$3 sm:$0x1f]
        %s143 = scalar_lea.vmem %s114, 32 [#allocation3]
        %v144 = vld [vmem:[%s143] ss:$3 sm:$0x1f]
        %s145 = scalar_lea.vmem %s114, 48 [#allocation3]
        %v146 = vld [vmem:[%s145] ss:$3 sm:$0x1f]
        %s147 = scalar_lea.vmem %s114, 1 [#allocation3]
        %v148 = vld [vmem:[%s147] ss:$3 sm:$0x1f]
        %s149 = scalar_lea.vmem %s114, 17 [#allocation3]
        %v150 = vld [vmem:[%s149] ss:$3 sm:$0x1f]
        %s151 = scalar_lea.vmem %s114, 33 [#allocation3]
        %v152 = vld [vmem:[%s151] ss:$3 sm:$0x1f]
        %s153 = scalar_lea.vmem %s114, 49 [#allocation3]
        %v154 = vld [vmem:[%s153] ss:$3 sm:$0x1f]
        %v155 = vmax.f32 %v140, %v148
        %v156 = vmax.f32 %v142, %v150
        %v157 = vmax.f32 %v144, %v152
        %v158 = vmax.f32 %v146, %v154
        %s159 = scalar_lea.vmem %s114, 2 [#allocation3]
        %v160 = vld [vmem:[%s159] ss:$3 sm:$0x1f]
        %s161 = scalar_lea.vmem %s114, 18 [#allocation3]
        %v162 = vld [vmem:[%s161] ss:$3 sm:$0x1f]
        %s163 = scalar_lea.vmem %s114, 34 [#allocation3]
        %v164 = vld [vmem:[%s163] ss:$3 sm:$0x1f]
        %s165 = scalar_lea.vmem %s114, 50 [#allocation3]
        %v166 = vld [vmem:[%s165] ss:$3 sm:$0x1f]
        %v167 = vmax.f32 %v155, %v160
        %v168 = vmax.f32 %v156, %v162
        %v169 = vmax.f32 %v157, %v164
        %v170 = vmax.f32 %v158, %v166
        %v171 = vld [vmem:[%s114 + $0xf] sm:$0x1]
        %v172 = vld [vmem:[%s114 + $0x1f] sm:$0x1]
        %v173 = vld [vmem:[%s114 + $0x2f] sm:$0x1]
        %v174 = vld [vmem:[%s114 + $0x3f] sm:$0x1]
        %v179 = vrot.slane %v171, 3
        %v180 = vrot.slane %v172, 3
        %v181 = vrot.slane %v173, 3
        %v182 = vrot.slane %v174, 3
        %vm187 = vcmask 1044480
        %v188 = vsel %vm187, %v167, %v179
        %v189 = vsel %vm187, %v168, %v180
        %v190 = vsel %vm187, %v169, %v181
        %v191 = vsel %vm187, %v170, %v182
        %192 = vxpose.xlu0.b32.start [1/16] %v188, 128
        %193 = vxpose.xlu0.b32.cont [2/16] 0.0, 128
        %194 = vxpose.xlu0.b32.cont [3/16] 0.0, 128
        %195 = vxpose.xlu0.b32.cont [4/16] 0.0, 128
        %196 = vxpose.xlu0.b32.cont [5/16] 0.0, 128
        %197 = vxpose.xlu0.b32.cont [6/16] 0.0, 128
        %198 = vxpose.xlu0.b32.cont [7/16] 0.0, 128
        %199 = vxpose.xlu0.b32.cont [8/16] 0.0, 128
        %200 = vxpose.xlu0.b32.cont [9/16] 0.0, 128
        %201 = vxpose.xlu0.b32.cont [10/16] 0.0, 128
        %202 = vxpose.xlu0.b32.cont [11/16] 0.0, 128
        %203 = vxpose.xlu0.b32.cont [12/16] 0.0, 128
        %204 = vxpose.xlu0.b32.cont [13/16] 0.0, 128
        %205 = vxpose.xlu0.b32.cont [14/16] 0.0, 128
        %206 = vxpose.xlu0.b32.cont [15/16] 0.0, 128
        %207 = vxpose.xlu0.b32.end [16/16] 0.0, 128
        %v208 = vpop.trf.xlu0
        %v209 = vpop.trf.xlu0
        %v210 = vpop.trf.xlu0
        %v211 = vpop.trf.xlu0
        %v212 = vpop.trf.xlu0
        %v213 = vpop.trf.xlu0
        %v214 = vpop.trf.xlu0
        %v215 = vpop.trf.xlu0
        %v216 = vpop.trf.xlu0
        %v217 = vpop.trf.xlu0
        %v218 = vpop.trf.xlu0
        %v219 = vpop.trf.xlu0
        %v220 = vpop.trf.xlu0
        %v221 = vpop.trf.xlu0
        %v222 = vpop.trf.xlu0
        %v223 = vpop.trf.xlu0
        %224 = vxpose.xlu0.b32.start [1/16] %v189, 128
        %225 = vxpose.xlu0.b32.cont [2/16] 0.0, 128
        %226 = vxpose.xlu0.b32.cont [3/16] 0.0, 128
        %227 = vxpose.xlu0.b32.cont [4/16] 0.0, 128
        %228 = vxpose.xlu0.b32.cont [5/16] 0.0, 128
        %229 = vxpose.xlu0.b32.cont [6/16] 0.0, 128
        %230 = vxpose.xlu0.b32.cont [7/16] 0.0, 128
        %231 = vxpose.xlu0.b32.cont [8/16] 0.0, 128
        %232 = vxpose.xlu0.b32.cont [9/16] 0.0, 128
        %233 = vxpose.xlu0.b32.cont [10/16] 0.0, 128
        %234 = vxpose.xlu0.b32.cont [11/16] 0.0, 128
        %235 = vxpose.xlu0.b32.cont [12/16] 0.0, 128
        %236 = vxpose.xlu0.b32.cont [13/16] 0.0, 128
        %237 = vxpose.xlu0.b32.cont [14/16] 0.0, 128
        %238 = vxpose.xlu0.b32.cont [15/16] 0.0, 128
        %239 = vxpose.xlu0.b32.end [16/16] 0.0, 128
        %v240 = vpop.trf.xlu0
        %v241 = vpop.trf.xlu0
        %v242 = vpop.trf.xlu0
        %v243 = vpop.trf.xlu0
        %v244 = vpop.trf.xlu0
        %v245 = vpop.trf.xlu0
        %v246 = vpop.trf.xlu0
        %v247 = vpop.trf.xlu0
        %v248 = vpop.trf.xlu0
        %v249 = vpop.trf.xlu0
        %v250 = vpop.trf.xlu0
        %v251 = vpop.trf.xlu0
        %v252 = vpop.trf.xlu0
        %v253 = vpop.trf.xlu0
        %v254 = vpop.trf.xlu0
        %v255 = vpop.trf.xlu0
        %256 = vxpose.xlu0.b32.start [1/16] %v190, 128
        %257 = vxpose.xlu0.b32.cont [2/16] 0.0, 128
        %258 = vxpose.xlu0.b32.cont [3/16] 0.0, 128
        %259 = vxpose.xlu0.b32.cont [4/16] 0.0, 128
        %260 = vxpose.xlu0.b32.cont [5/16] 0.0, 128
        %261 = vxpose.xlu0.b32.cont [6/16] 0.0, 128
        %262 = vxpose.xlu0.b32.cont [7/16] 0.0, 128
        %263 = vxpose.xlu0.b32.cont [8/16] 0.0, 128
        %264 = vxpose.xlu0.b32.cont [9/16] 0.0, 128
        %265 = vxpose.xlu0.b32.cont [10/16] 0.0, 128
        %266 = vxpose.xlu0.b32.cont [11/16] 0.0, 128
        %267 = vxpose.xlu0.b32.cont [12/16] 0.0, 128
        %268 = vxpose.xlu0.b32.cont [13/16] 0.0, 128
        %269 = vxpose.xlu0.b32.cont [14/16] 0.0, 128
        %270 = vxpose.xlu0.b32.cont [15/16] 0.0, 128
        %271 = vxpose.xlu0.b32.end [16/16] 0.0, 128
        %v272 = vpop.trf.xlu0
        %v273 = vpop.trf.xlu0
        %v274 = vpop.trf.xlu0
        %v275 = vpop.trf.xlu0
        %v276 = vpop.trf.xlu0
        %v277 = vpop.trf.xlu0
        %v278 = vpop.trf.xlu0
        %v279 = vpop.trf.xlu0
        %v280 = vpop.trf.xlu0
        %v281 = vpop.trf.xlu0
        %v282 = vpop.trf.xlu0
        %v283 = vpop.trf.xlu0
        %v284 = vpop.trf.xlu0
        %v285 = vpop.trf.xlu0
        %v286 = vpop.trf.xlu0
        %v287 = vpop.trf.xlu0
        %288 = vxpose.xlu0.b32.start [1/16] %v191, 128
        %289 = vxpose.xlu0.b32.cont [2/16] 0.0, 128
        %290 = vxpose.xlu0.b32.cont [3/16] 0.0, 128
        %291 = vxpose.xlu0.b32.cont [4/16] 0.0, 128
        %292 = vxpose.xlu0.b32.cont [5/16] 0.0, 128
        %293 = vxpose.xlu0.b32.cont [6/16] 0.0, 128
        %294 = vxpose.xlu0.b32.cont [7/16] 0.0, 128
        %295 = vxpose.xlu0.b32.cont [8/16] 0.0, 128
        %296 = vxpose.xlu0.b32.cont [9/16] 0.0, 128
        %297 = vxpose.xlu0.b32.cont [10/16] 0.0, 128
        %298 = vxpose.xlu0.b32.cont [11/16] 0.0, 128
        %299 = vxpose.xlu0.b32.cont [12/16] 0.0, 128
        %300 = vxpose.xlu0.b32.cont [13/16] 0.0, 128
        %301 = vxpose.xlu0.b32.cont [14/16] 0.0, 128
        %302 = vxpose.xlu0.b32.cont [15/16] 0.0, 128
        %303 = vxpose.xlu0.b32.end [16/16] 0.0, 128
        %v304 = vpop.trf.xlu0
        %v305 = vpop.trf.xlu0
        %v306 = vpop.trf.xlu0
        %v307 = vpop.trf.xlu0
        %v308 = vpop.trf.xlu0
        %v309 = vpop.trf.xlu0
        %v310 = vpop.trf.xlu0
        %v311 = vpop.trf.xlu0
        %v312 = vpop.trf.xlu0
        %v313 = vpop.trf.xlu0
        %v314 = vpop.trf.xlu0
        %v315 = vpop.trf.xlu0
        %v316 = vpop.trf.xlu0
        %v317 = vpop.trf.xlu0
        %v318 = vpop.trf.xlu0
        %v319 = vpop.trf.xlu0
        %vm320 = vcmask 48128
        %321 = vst.msk [vmem:[#allocation2] sm:$0xff] %vm320, %v208
        %322 = vst.msk [vmem:[#allocation2 + $0x8] sm:$0xff] %vm320, %v209
        %323 = vst.msk [vmem:[#allocation2 + $0x10] sm:$0xff] %vm320, %v240
        %324 = vst.msk [vmem:[#allocation2 + $0x18] sm:$0xff] %vm320, %v241
        %325 = vst.msk [vmem:[#allocation2 + $0x20] sm:$0xff] %vm320, %v272
        %326 = vst.msk [vmem:[#allocation2 + $0x28] sm:$0xff] %vm320, %v273
        %327 = vst.msk [vmem:[#allocation2 + $0x30] sm:$0xff] %vm320, %v304
        %328 = vst.msk [vmem:[#allocation2 + $0x38] sm:$0xff] %vm320, %v305
        %v329 = vld [vmem:[#allocation2] ss:$3 sm:$0x1f]
        %s330 = scalar_lea.vmem [#allocation2], 16
        %v331 = vld [vmem:[%s330] ss:$3 sm:$0x1f]
        %s332 = scalar_lea.vmem [#allocation2], 32
        %v333 = vld [vmem:[%s332] ss:$3 sm:$0x1f]
        %s334 = scalar_lea.vmem [#allocation2], 48
        %v335 = vld [vmem:[%s334] ss:$3 sm:$0x1f]
        %s336 = scalar_lea.vmem [#allocation2], 1
        %v337 = vld [vmem:[%s336] ss:$3 sm:$0x1f]
        %s338 = scalar_lea.vmem [#allocation2], 17
        %v339 = vld [vmem:[%s338] ss:$3 sm:$0x1f]
        %s340 = scalar_lea.vmem [#allocation2], 33
        %v341 = vld [vmem:[%s340] ss:$3 sm:$0x1f]
        %s342 = scalar_lea.vmem [#allocation2], 49
        %v343 = vld [vmem:[%s342] ss:$3 sm:$0x1f]
        %v344 = vmax.f32 %v329, %v337
        %v345 = vmax.f32 %v331, %v339
        %v346 = vmax.f32 %v333, %v341
        %v347 = vmax.f32 %v335, %v343
        %s348 = scalar_lea.vmem [#allocation2], 2
        %v349 = vld [vmem:[%s348] ss:$3 sm:$0x1f]
        %s350 = scalar_lea.vmem [#allocation2], 18
        %v351 = vld [vmem:[%s350] ss:$3 sm:$0x1f]
        %s352 = scalar_lea.vmem [#allocation2], 34
        %v353 = vld [vmem:[%s352] ss:$3 sm:$0x1f]
        %s354 = scalar_lea.vmem [#allocation2], 50
        %v355 = vld [vmem:[%s354] ss:$3 sm:$0x1f]
        %v356 = vmax.f32 %v344, %v349
        %v357 = vmax.f32 %v345, %v351
        %v358 = vmax.f32 %v346, %v353
        %v359 = vmax.f32 %v347, %v355
        %v360 = vld [vmem:[#allocation2 + $0xf] sm:$0x1]
        %v361 = vld [vmem:[#allocation2 + $0x1f] sm:$0x1]
        %v362 = vld [vmem:[#allocation2 + $0x2f] sm:$0x1]
        %v363 = vld [vmem:[#allocation2 + $0x3f] sm:$0x1]
        %v368 = vrot.slane %v360, 3
        %v369 = vrot.slane %v361, 3
        %v370 = vrot.slane %v362, 3
        %v371 = vrot.slane %v363, 3
        %v376 = vsel %vm187, %v356, %v368
        %v377 = vsel %vm187, %v357, %v369
        %v378 = vsel %vm187, %v358, %v370
        %v379 = vsel %vm187, %v359, %v371
        %380 = vxpose.xlu0.b32.start [1/16] %v376, 128
        %381 = vxpose.xlu0.b32.cont [2/16] 0.0, 128
        %382 = vxpose.xlu0.b32.cont [3/16] 0.0, 128
        %383 = vxpose.xlu0.b32.cont [4/16] 0.0, 128
        %384 = vxpose.xlu0.b32.cont [5/16] 0.0, 128
        %385 = vxpose.xlu0.b32.cont [6/16] 0.0, 128
        %386 = vxpose.xlu0.b32.cont [7/16] 0.0, 128
        %387 = vxpose.xlu0.b32.cont [8/16] 0.0, 128
        %388 = vxpose.xlu0.b32.cont [9/16] 0.0, 128
        %389 = vxpose.xlu0.b32.cont [10/16] 0.0, 128
        %390 = vxpose.xlu0.b32.cont [11/16] 0.0, 128
        %391 = vxpose.xlu0.b32.cont [12/16] 0.0, 128
        %392 = vxpose.xlu0.b32.cont [13/16] 0.0, 128
        %393 = vxpose.xlu0.b32.cont [14/16] 0.0, 128
        %394 = vxpose.xlu0.b32.cont [15/16] 0.0, 128
        %395 = vxpose.xlu0.b32.end [16/16] 0.0, 128
        %v396 = vpop.trf.xlu0
        %v397 = vpop.trf.xlu0
        %v398 = vpop.trf.xlu0
        %v399 = vpop.trf.xlu0
        %v400 = vpop.trf.xlu0
        %v401 = vpop.trf.xlu0
        %v402 = vpop.trf.xlu0
        %v403 = vpop.trf.xlu0
        %v404 = vpop.trf.xlu0
        %v405 = vpop.trf.xlu0
        %v406 = vpop.trf.xlu0
        %v407 = vpop.trf.xlu0
        %v408 = vpop.trf.xlu0
        %v409 = vpop.trf.xlu0
        %v410 = vpop.trf.xlu0
        %v411 = vpop.trf.xlu0
        %412 = vxpose.xlu0.b32.start [1/16] %v377, 128
        %413 = vxpose.xlu0.b32.cont [2/16] 0.0, 128
        %414 = vxpose.xlu0.b32.cont [3/16] 0.0, 128
        %415 = vxpose.xlu0.b32.cont [4/16] 0.0, 128
        %416 = vxpose.xlu0.b32.cont [5/16] 0.0, 128
        %417 = vxpose.xlu0.b32.cont [6/16] 0.0, 128
        %418 = vxpose.xlu0.b32.cont [7/16] 0.0, 128
        %419 = vxpose.xlu0.b32.cont [8/16] 0.0, 128
        %420 = vxpose.xlu0.b32.cont [9/16] 0.0, 128
        %421 = vxpose.xlu0.b32.cont [10/16] 0.0, 128
        %422 = vxpose.xlu0.b32.cont [11/16] 0.0, 128
        %423 = vxpose.xlu0.b32.cont [12/16] 0.0, 128
        %424 = vxpose.xlu0.b32.cont [13/16] 0.0, 128
        %425 = vxpose.xlu0.b32.cont [14/16] 0.0, 128
        %426 = vxpose.xlu0.b32.cont [15/16] 0.0, 128
        %427 = vxpose.xlu0.b32.end [16/16] 0.0, 128
        %v428 = vpop.trf.xlu0
        %v429 = vpop.trf.xlu0
        %v430 = vpop.trf.xlu0
        %v431 = vpop.trf.xlu0
        %v432 = vpop.trf.xlu0
        %v433 = vpop.trf.xlu0
        %v434 = vpop.trf.xlu0
        %v435 = vpop.trf.xlu0
        %v436 = vpop.trf.xlu0
        %v437 = vpop.trf.xlu0
        %v438 = vpop.trf.xlu0
        %v439 = vpop.trf.xlu0
        %v440 = vpop.trf.xlu0
        %v441 = vpop.trf.xlu0
        %v442 = vpop.trf.xlu0
        %v443 = vpop.trf.xlu0
        %444 = vxpose.xlu0.b32.start [1/16] %v378, 128
        %445 = vxpose.xlu0.b32.cont [2/16] 0.0, 128
        %446 = vxpose.xlu0.b32.cont [3/16] 0.0, 128
        %447 = vxpose.xlu0.b32.cont [4/16] 0.0, 128
        %448 = vxpose.xlu0.b32.cont [5/16] 0.0, 128
        %449 = vxpose.xlu0.b32.cont [6/16] 0.0, 128
        %450 = vxpose.xlu0.b32.cont [7/16] 0.0, 128
        %451 = vxpose.xlu0.b32.cont [8/16] 0.0, 128
        %452 = vxpose.xlu0.b32.cont [9/16] 0.0, 128
        %453 = vxpose.xlu0.b32.cont [10/16] 0.0, 128
        %454 = vxpose.xlu0.b32.cont [11/16] 0.0, 128
        %455 = vxpose.xlu0.b32.cont [12/16] 0.0, 128
        %456 = vxpose.xlu0.b32.cont [13/16] 0.0, 128
        %457 = vxpose.xlu0.b32.cont [14/16] 0.0, 128
        %458 = vxpose.xlu0.b32.cont [15/16] 0.0, 128
        %459 = vxpose.xlu0.b32.end [16/16] 0.0, 128
        %v460 = vpop.trf.xlu0
        %v461 = vpop.trf.xlu0
        %v462 = vpop.trf.xlu0
        %v463 = vpop.trf.xlu0
        %v464 = vpop.trf.xlu0
        %v465 = vpop.trf.xlu0
        %v466 = vpop.trf.xlu0
        %v467 = vpop.trf.xlu0
        %v468 = vpop.trf.xlu0
        %v469 = vpop.trf.xlu0
        %v470 = vpop.trf.xlu0
        %v471 = vpop.trf.xlu0
        %v472 = vpop.trf.xlu0
        %v473 = vpop.trf.xlu0
        %v474 = vpop.trf.xlu0
        %v475 = vpop.trf.xlu0
        %476 = vxpose.xlu0.b32.start [1/16] %v379, 128
        %477 = vxpose.xlu0.b32.cont [2/16] 0.0, 128
        %478 = vxpose.xlu0.b32.cont [3/16] 0.0, 128
        %479 = vxpose.xlu0.b32.cont [4/16] 0.0, 128
        %480 = vxpose.xlu0.b32.cont [5/16] 0.0, 128
        %481 = vxpose.xlu0.b32.cont [6/16] 0.0, 128
        %482 = vxpose.xlu0.b32.cont [7/16] 0.0, 128
        %483 = vxpose.xlu0.b32.cont [8/16] 0.0, 128
        %484 = vxpose.xlu0.b32.cont [9/16] 0.0, 128
        %485 = vxpose.xlu0.b32.cont [10/16] 0.0, 128
        %486 = vxpose.xlu0.b32.cont [11/16] 0.0, 128
        %487 = vxpose.xlu0.b32.cont [12/16] 0.0, 128
        %488 = vxpose.xlu0.b32.cont [13/16] 0.0, 128
        %489 = vxpose.xlu0.b32.cont [14/16] 0.0, 128
        %490 = vxpose.xlu0.b32.cont [15/16] 0.0, 128
        %491 = vxpose.xlu0.b32.end [16/16] 0.0, 128
        %v492 = vpop.trf.xlu0
        %v493 = vpop.trf.xlu0
        %v494 = vpop.trf.xlu0
        %v495 = vpop.trf.xlu0
        %v496 = vpop.trf.xlu0
        %v497 = vpop.trf.xlu0
        %v498 = vpop.trf.xlu0
        %v499 = vpop.trf.xlu0
        %v500 = vpop.trf.xlu0
        %v501 = vpop.trf.xlu0
        %v502 = vpop.trf.xlu0
        %v503 = vpop.trf.xlu0
        %v504 = vpop.trf.xlu0
        %v505 = vpop.trf.xlu0
        %v506 = vpop.trf.xlu0
        %v507 = vpop.trf.xlu0
        %vm508 = vcmask 46080
        %509 = vst.msk [vmem:[%s138] sm:$0x3f] %vm508, %v396
        %510 = vst.msk [vmem:[%s138 + $0x8] sm:$0x3f] %vm508, %v428
        %511 = vst.msk [vmem:[%s138 + $0x10] sm:$0x3f] %vm508, %v460
        %512 = vst.msk [vmem:[%s138 + $0x18] sm:$0x3f] %vm508, %v492
        %s513 = smul.u32 4, %s15
        %p514 = scmp.lt.s32.totalorder %s513, 7
        %s515 = scalar_select %p514, %s513, 7
        %s516 = smul.addr %s515, 8
        %s517 = scalar_lea.vmem %s1, %s516
        // Predicated region
        $region29: #{tpu_custom_call.1} parent=23 // pred_check
          %p518 = pneg %p59
        $region30: #{tpu_custom_call.1} parent=23 // pred_check_branch
          %520 = sbr.rel (%p518) target = $region32
        $region31: #{tpu_custom_call.1} parent=23 // pred_region
          %s521 = smul.u32 4, %s15
        $region32: #{tpu_custom_call.1} parent=23 // pred_fallthru
          _
      $region24: #{tpu_custom_call.1} parent=5 // pred_fallthru
        _
      %p522 = scmp.le.s32.totalorder 2, %s10
      // Predicated region
      $region33: #{tpu_custom_call.1} parent=5 // pred_check
        %p523 = pneg %p522
      $region34: #{tpu_custom_call.1} parent=5 // pred_check_branch
        %525 = sbr.rel (%p523) target = $region36
      $region35: #{tpu_custom_call.1} parent=5 // pred_region
        %s526 = ssub.s32 %s10, 2
        // Predicated region
        $region37: #{tpu_custom_call.1} parent=35 // pred_check
          %p527 = pneg %p65
        $region38: #{tpu_custom_call.1} parent=35 // pred_check_branch
          %529 = sbr.rel (%p527) target = $region40
        $region39: #{tpu_custom_call.1} parent=35 // pred_region
          %s530 = smul.u32 4, %s16
          %p531 = scmp.lt.s32.totalorder %s530, 7
          %s532 = scalar_select %p531, %s530, 7
          %s533 = smul.addr %s532, 8
          %s534 = scalar_lea.vmem %s1, %s533
        $region40: #{tpu_custom_call.1} parent=35 // pred_fallthru
          _
      $region36: #{tpu_custom_call.1} parent=5 // pred_fallthru
        _
    $region6: #{tpu_custom_call.1} parent=1 // loop_footer
      %s14 = sadd.s32 1, %s10
    $region7: #{tpu_custom_call.1} parent=1 // loop_footer_branch
      %9 = sbr.rel target = $region3
    $region8: #{tpu_custom_call.1} parent=1 // loop_exit
      _
    %535 = vsyncpa [#allocation4], 1
    %s536 = scalar_lea.sflag [#allocation4], 1
    %537 = vsyncpa %s536, 1

</llo_original>
